<compile_context>
chip_gen: v7x
topology: tpu7x:2x2x1
jax: 0.10.0
libtpu: 0.0.40
codegen_flags: <defaults>
</compile_context>

<pallas_src>
import functools
import math

import jax
import jax.numpy as jnp
from jax.experimental import pallas as pl
from jax.experimental.pallas import tpu as pltpu


def _round_up(n, m):
    return ((n + m - 1) // m) * m


def _gelu_new(x):
    # HF "gelu_new": 0.5 * x * (1 + tanh(sqrt(2/pi) * (x + 0.044715 * x^3)))
    c = math.sqrt(2.0 / math.pi)
    return 0.5 * x * (1.0 + jnp.tanh(c * (x + 0.044715 * (x * x * x))))


def head_transform_kernel(
    x_ref,        # (tm, H)  token tile of hidden_states
    wd_ref,       # (H, H)   dense weight, stored [in, out]
    bd_ref,       # (1, H)   dense bias
    gamma_ref,    # (1, H)   LayerNorm weight
    beta_ref,     # (1, H)   LayerNorm bias
    out_ref,      # (tm, H)  transformed tile
    *,
    eps,          # compile-time layer_norm_eps
    mxu_dtype,    # compile-time dtype for the MXU operands
):
    # --- dense: x @ Wd + bd (explicit operand dtype, f32 accumulation) -----
    a = x_ref[...].astype(mxu_dtype)
    w = wd_ref[...].astype(mxu_dtype)
    h = jnp.dot(a, w, preferred_element_type=jnp.float32)
    h = h + bd_ref[...].astype(jnp.float32)

    # --- activation (gelu_new, FNet default hidden_act), f32 ---------------
    h = _gelu_new(h)

    # --- LayerNorm over hidden dim, f32 math --------------------------------
    mean = jnp.mean(h, axis=-1, keepdims=True)
    centered = h - mean
    var = jnp.mean(centered * centered, axis=-1, keepdims=True)
    inv = jax.lax.rsqrt(var + eps)
    h = centered * inv * gamma_ref[...].astype(jnp.float32) \
        + beta_ref[...].astype(jnp.float32)

    out_ref[...] = h.astype(out_ref.dtype)


def fnet_prediction_head_transform(hidden_states, params, *, tm=512,
                                    mxu_dtype=None):
    """hidden_states: [B, S, H] -> transformed hidden_states: [B, S, H]."""
    B, S, H = hidden_states.shape
    T = B * S
    out_dtype = hidden_states.dtype
    x2d = hidden_states.reshape(T, H)

    in_bytes = jnp.dtype(hidden_states.dtype).itemsize
    out_bytes = jnp.dtype(out_dtype).itemsize
    w_bytes = jnp.dtype(params["dense_w"].dtype).itemsize
    p_bytes = jnp.dtype(params["ln_gamma"].dtype).itemsize

    # MXU operand dtype: default = promotion of activation/weight dtypes
    # (bf16 inputs stay bf16; mixed f32/bf16 resolves explicitly, no silent
    # promotion inside the kernel).  Override to bf16 on v5e if desired.
    if mxu_dtype is None:
        mxu_dtype = jnp.promote_types(hidden_states.dtype,
                                      params["dense_w"].dtype)
    mxu_dtype = jnp.dtype(mxu_dtype)

    # --- pick the token tile -------------------------------------------------
    # Sublane packing: 16 rows for sub-32-bit activations, 8 rows for f32.
    pack = 16 if in_bytes < 4 else 8

    if T <= pack:
        tm_eff = T                                   # one (partial) block
    else:
        tm_eff = min(tm, _round_up(T, pack))
        # Prefer >= 2 grid steps so megacore / both v7x TCs get work.
        if tm_eff >= T and T >= 2 * pack:
            tm_eff = max(pack, _round_up((T + 1) // 2, pack))

    # Cap tm_eff so resident + double-buffered tile traffic fits a budget that
    # works on every generation (v7x: 64 MiB physical per TC).
    VMEM_BUDGET = 40 * 1024 * 1024
    resident_bytes = H * H * w_bytes + 4 * H * p_bytes   # single-buffered
    per_row_bytes = H * (2 * in_bytes + 2 * out_bytes)   # x + out, 2 bufs each
    if resident_bytes + tm_eff * per_row_bytes > VMEM_BUDGET:
        rows = (VMEM_BUDGET - resident_bytes) // per_row_bytes
        tm_eff = max(pack, (rows // pack) * pack)

    grid = (pl.cdiv(T, tm_eff),)   # last block may be partial; writeback masked

    vmem_need = resident_bytes + tm_eff * per_row_bytes
    vmem_limit = int(min(60 * 1024 * 1024,
                         max(2 * vmem_need, 16 * 1024 * 1024)))

    kernel = functools.partial(
        head_transform_kernel,
        eps=float(params["ln_eps"]),
        mxu_dtype=mxu_dtype,
    )

    cost = pl.CostEstimate(
        flops=2 * T * H * H + 12 * T * H,
        transcendentals=T * H,                       # tanh per element
        bytes_accessed=T * H * (in_bytes + out_bytes)
                       + H * H * w_bytes + 4 * H * p_bytes,
    )

    out = pl.pallas_call(
        kernel,
        out_shape=jax.ShapeDtypeStruct((T, H), out_dtype),
        grid_spec=pltpu.PrefetchScalarGridSpec(
            num_scalar_prefetch=0,
            grid=grid,
            in_specs=[
                # streaming token tile (default double-buffered)
                pl.BlockSpec((tm_eff, H), lambda i: (i, 0)),
                # grid-invariant operands: single-buffered (index never moves)
                pl.BlockSpec((H, H), lambda i: (0, 0),
                             pipeline_mode=pl.Buffered(1)),
                pl.BlockSpec((1, H), lambda i: (0, 0),
                             pipeline_mode=pl.Buffered(1)),
                pl.BlockSpec((1, H), lambda i: (0, 0),
                             pipeline_mode=pl.Buffered(1)),
                pl.BlockSpec((1, H), lambda i: (0, 0),
                             pipeline_mode=pl.Buffered(1)),
            ],
            out_specs=pl.BlockSpec((tm_eff, H), lambda i: (i, 0)),
        ),
        compiler_params=pltpu.CompilerParams(
            dimension_semantics=("parallel",),       # megacore splits tokens
            vmem_limit_bytes=vmem_limit,
        ),
        cost_estimate=cost,
    )(
        x2d,
        params["dense_w"], params["dense_b"],
        params["ln_gamma"], params["ln_beta"],
    )

    return out.reshape(B, S, H)


def init_params(key, hidden_size, layer_norm_eps=1e-12, dtype=jnp.float32):
    k1, k2 = jax.random.split(key, 2)
    scale_h = 1.0 / math.sqrt(hidden_size)
    return {
        # stored transposed relative to torch nn.Linear ([out,in]) -> [in,out]
        "dense_w": (jax.random.normal(k1, (hidden_size, hidden_size),
                                      jnp.float32) * scale_h).astype(dtype),
        "dense_b": (jax.random.normal(k2, (1, hidden_size),
                                      jnp.float32) * 0.02).astype(dtype),
        "ln_gamma": jnp.ones((1, hidden_size), dtype),
        "ln_beta": jnp.zeros((1, hidden_size), dtype),
        "ln_eps": layer_norm_eps,
    }


def _reference(hidden_states, params):
    """Pure-JAX reference for numerical sanity check."""
    x = hidden_states.astype(jnp.float32)
    h = x @ params["dense_w"].astype(jnp.float32) \
        + params["dense_b"].astype(jnp.float32)[0]
    h = _gelu_new(h)
    mean = jnp.mean(h, axis=-1, keepdims=True)
    var = jnp.mean((h - mean) ** 2, axis=-1, keepdims=True)
    h = (h - mean) * jax.lax.rsqrt(var + params["ln_eps"])
    h = h * params["ln_gamma"].astype(jnp.float32)[0] \
        + params["ln_beta"].astype(jnp.float32)[0]
    return h.astype(hidden_states.dtype)


if __name__ == "__main__":
    key = jax.random.PRNGKey(0)
    k_x, k_p, k_x2 = jax.random.split(key, 3)

    # Test 1: tile-aligned token count (batch=2, seq=8, hidden=32).
    B, S, H = 2, 8, 32
    hidden_states = jax.random.normal(k_x, (B, S, H), jnp.float32)
    params = init_params(k_p, hidden_size=H)

    out = fnet_prediction_head_transform(hidden_states, params)
    out = jax.block_until_ready(out)
    ref = _reference(hidden_states, params)
    assert out.shape == (B, S, H)
    assert jnp.allclose(out, ref, atol=1e-4, rtol=1e-4)

    # Test 2: ragged token count (exercises the masked partial last block).
    B2, S2 = 3, 7
    hs2 = jax.random.normal(k_x2, (B2, S2, H), jnp.float32)
    out2 = jax.block_until_ready(fnet_prediction_head_transform(hs2, params))
    ref2 = _reference(hs2, params)
    assert out2.shape == (B2, S2, H)
    assert jnp.allclose(out2, ref2, atol=1e-4, rtol=1e-4)

    print("KERNEL_OK")
</pallas_src>

<mosaic_0001>
module attributes {stable_mosaic.version = 11 : i64} {
  func.func @head_transform_kernel(%arg0: i32, %arg1: memref<8x32xf32, #tpu.memory_space<vmem>>, %arg2: memref<32x32xf32, #tpu.memory_space<vmem>>, %arg3: memref<1x32xf32, #tpu.memory_space<vmem>>, %arg4: memref<1x32xf32, #tpu.memory_space<vmem>>, %arg5: memref<1x32xf32, #tpu.memory_space<vmem>>, %arg6: memref<8x32xf32, #tpu.memory_space<vmem>>) attributes {dimension_semantics = [#tpu.dimension_semantics<parallel>], iteration_bounds = array<i64: 2>, scalar_prefetch = 0 : i64, scratch_operands = 0 : i64, tpu.core_type = #tpu.core_type<tc>, window_params = [{transform_indices = @transform_0, window_bounds = array<i64: 8, 32>}, {pipeline_mode = #tpu.pipeline_mode<synchronous>, transform_indices = @transform_1, window_bounds = array<i64: 32, 32>}, {pipeline_mode = #tpu.pipeline_mode<synchronous>, transform_indices = @transform_2, window_bounds = array<i64: 1, 32>}, {pipeline_mode = #tpu.pipeline_mode<synchronous>, transform_indices = @transform_3, window_bounds = array<i64: 1, 32>}, {pipeline_mode = #tpu.pipeline_mode<synchronous>, transform_indices = @transform_4, window_bounds = array<i64: 1, 32>}, {transform_indices = @transform_5, window_bounds = array<i64: 8, 32>}]} {
    %c0 = arith.constant 0 : index
    %c0_0 = arith.constant 0 : index
    %0 = vector.load %arg1[%c0, %c0_0] : memref<8x32xf32, #tpu.memory_space<vmem>>, vector<8x32xf32>
    %c0_1 = arith.constant 0 : index
    %c0_2 = arith.constant 0 : index
    %1 = vector.load %arg2[%c0_1, %c0_2] : memref<32x32xf32, #tpu.memory_space<vmem>>, vector<32x32xf32>
    %cst = arith.constant dense<0.000000e+00> : vector<8x32xf32>
    %2 = tpu.matmul %0, %1, %cst {dimension_numbers = #tpu.dot_dimension_numbers<[1], [0], [0], [1], [0, 0, 1, 1], [], []>} : vector<8x32xf32>, vector<32x32xf32>, vector<8x32xf32> -> vector<8x32xf32>
    %c0_3 = arith.constant 0 : index
    %c0_4 = arith.constant 0 : index
    %3 = vector.load %arg3[%c0_3, %c0_4] : memref<1x32xf32, #tpu.memory_space<vmem>>, vector<1x32xf32>
    %4 = vector.broadcast %3 : vector<1x32xf32> to vector<8x32xf32>
    %5 = arith.addf %2, %4 : vector<8x32xf32>
    %cst_5 = arith.constant 5.000000e-01 : f32
    %6 = vector.broadcast %cst_5 : f32 to vector<8x32xf32>
    %7 = arith.mulf %6, %5 : vector<8x32xf32>
    %8 = arith.mulf %5, %5 : vector<8x32xf32>
    %9 = arith.mulf %8, %5 : vector<8x32xf32>
    %cst_6 = arith.constant 4.471500e-02 : f32
    %10 = vector.broadcast %cst_6 : f32 to vector<8x32xf32>
    %11 = arith.mulf %10, %9 : vector<8x32xf32>
    %12 = arith.addf %5, %11 : vector<8x32xf32>
    %cst_7 = arith.constant 0.797884583 : f32
    %13 = vector.broadcast %cst_7 : f32 to vector<8x32xf32>
    %14 = arith.mulf %13, %12 : vector<8x32xf32>
    %15 = math.tanh %14 : vector<8x32xf32>
    %cst_8 = arith.constant 1.000000e+00 : f32
    %16 = vector.broadcast %cst_8 : f32 to vector<8x32xf32>
    %17 = arith.addf %16, %15 : vector<8x32xf32>
    %18 = arith.mulf %7, %17 : vector<8x32xf32>
    %cst_9 = arith.constant dense<0.000000e+00> : vector<8xf32>
    %19 = vector.multi_reduction <add>, %18, %cst_9 [1] : vector<8x32xf32> to vector<8xf32>
    %20 = vector.shape_cast %19 : vector<8xf32> to vector<8x1xf32>
    %cst_10 = arith.constant 3.200000e+01 : f32
    %21 = vector.broadcast %cst_10 : f32 to vector<8x1xf32>
    %22 = arith.divf %20, %21 : vector<8x1xf32>
    %23 = vector.broadcast %22 : vector<8x1xf32> to vector<8x32xf32>
    %24 = arith.subf %18, %23 : vector<8x32xf32>
    %25 = arith.mulf %24, %24 : vector<8x32xf32>
    %cst_11 = arith.constant dense<0.000000e+00> : vector<8xf32>
    %26 = vector.multi_reduction <add>, %25, %cst_11 [1] : vector<8x32xf32> to vector<8xf32>
    %27 = vector.shape_cast %26 : vector<8xf32> to vector<8x1xf32>
    %cst_12 = arith.constant 3.200000e+01 : f32
    %28 = vector.broadcast %cst_12 : f32 to vector<8x1xf32>
    %29 = arith.divf %27, %28 : vector<8x1xf32>
    %cst_13 = arith.constant 9.99999996E-13 : f32
    %30 = vector.broadcast %cst_13 : f32 to vector<8x1xf32>
    %31 = arith.addf %29, %30 : vector<8x1xf32>
    %32 = math.rsqrt %31 : vector<8x1xf32>
    %33 = vector.broadcast %32 : vector<8x1xf32> to vector<8x32xf32>
    %34 = arith.mulf %24, %33 : vector<8x32xf32>
    %c0_14 = arith.constant 0 : index
    %c0_15 = arith.constant 0 : index
    %35 = vector.load %arg4[%c0_14, %c0_15] : memref<1x32xf32, #tpu.memory_space<vmem>>, vector<1x32xf32>
    %36 = vector.broadcast %35 : vector<1x32xf32> to vector<8x32xf32>
    %37 = arith.mulf %34, %36 : vector<8x32xf32>
    %c0_16 = arith.constant 0 : index
    %c0_17 = arith.constant 0 : index
    %38 = vector.load %arg5[%c0_16, %c0_17] : memref<1x32xf32, #tpu.memory_space<vmem>>, vector<1x32xf32>
    %39 = vector.broadcast %38 : vector<1x32xf32> to vector<8x32xf32>
    %40 = arith.addf %37, %39 : vector<8x32xf32>
    %c0_18 = arith.constant 0 : index
    %c0_19 = arith.constant 0 : index
    %41 = vector.load %arg6[%c0_18, %c0_19] : memref<8x32xf32, #tpu.memory_space<vmem>>, vector<8x32xf32>
    tpu.vector_store %arg6[%c0_18, %c0_19], %40 {strides = array<i32>} : memref<8x32xf32, #tpu.memory_space<vmem>>, vector<8x32xf32>,
    return
  }
  func.func @transform_0(%arg0: i32) -> (i32, i32) {
    %c0_i32 = arith.constant 0 : i32
    %c0_i32_0 = arith.constant 0 : i32
    return %arg0, %c0_i32 : i32, i32
  }
  func.func @transform_1(%arg0: i32) -> (i32, i32) {
    %c0_i32 = arith.constant 0 : i32
    %c0_i32_0 = arith.constant 0 : i32
    %c0_i32_1 = arith.constant 0 : i32
    return %c0_i32, %c0_i32_0 : i32, i32
  }
  func.func @transform_2(%arg0: i32) -> (i32, i32) {
    %c0_i32 = arith.constant 0 : i32
    %c0_i32_0 = arith.constant 0 : i32
    %c0_i32_1 = arith.constant 0 : i32
    return %c0_i32, %c0_i32_0 : i32, i32
  }
  func.func @transform_3(%arg0: i32) -> (i32, i32) {
    %c0_i32 = arith.constant 0 : i32
    %c0_i32_0 = arith.constant 0 : i32
    %c0_i32_1 = arith.constant 0 : i32
    return %c0_i32, %c0_i32_0 : i32, i32
  }
  func.func @transform_4(%arg0: i32) -> (i32, i32) {
    %c0_i32 = arith.constant 0 : i32
    %c0_i32_0 = arith.constant 0 : i32
    %c0_i32_1 = arith.constant 0 : i32
    return %c0_i32, %c0_i32_0 : i32, i32
  }
  func.func @transform_5(%arg0: i32) -> (i32, i32) {
    %c0_i32 = arith.constant 0 : i32
    %c0_i32_0 = arith.constant 0 : i32
    return %arg0, %c0_i32 : i32, i32
  }
}

</mosaic_0001>

<llo_original>
// kernel: tpu_custom_call.1
$region0: #{tpu_custom_call.1}
  #allocation0 [shape = 'u32[]', space=smem, size = 0x4, offset = 0x4, fixed_abs, tag = 'smem constant byte address 0x4 - core index']
  #allocation1 [shape = 'u32[144,128]{1,0:T(1,128)}', space=vmem, size = 0x12000, scoped, tag = 'internal scratch']
  %s0 = inlined_call_operand.hbm [shape: f32[16,32], index: 0, kind: input, shape index: {}]
  %s1 = inlined_call_operand.hbm [shape: f32[32,32], index: 1, kind: input, shape index: {}]
  %s2 = inlined_call_operand.vmem [shape: f32[1,32], index: 2, kind: input, shape index: {}]
  %s3 = inlined_call_operand.vmem [shape: f32[1,32], index: 3, kind: input, shape index: {}]
  %s4 = inlined_call_operand.vmem [shape: f32[1,32], index: 4, kind: input, shape index: {}]
  %s5 = inlined_call_operand.hbm [shape: f32[16,32], index: 5, kind: output, shape index: {}]
  %s6 = sld [smem:[#allocation0]]
  $region61: #{tpu_custom_call.1} parent=0
    _
  %s8 = ssub.s32 1, %s6
  %s9 = scalar_select 0, %s8, %s6
  $region1: #{tpu_custom_call.1} parent=0
    #allocation2 [shape = 'u8[8192]{0}', space=vmem, size = 0x2000, scoped, tag = 'input window, operand 0']
    #allocation3 [shape = 's32[2]{0}', space=sflag, size = 0x8, scoped, tag = 'scoped memory for tpu_custom_call.1']
    #allocation4 [shape = 's32[2]{0}', space=sflag, size = 0x8, scoped, tag = 'scoped memory for tpu_custom_call.1']
    #allocation5 [shape = 'u8[16384]{0}', space=vmem, size = 0x4000, scoped, tag = 'input window, operand 1, single buffered']
    #allocation6 [shape = 's32[1]{0}', space=sflag, size = 0x4, scoped, tag = 'scoped memory for tpu_custom_call.1']
    #allocation7 [shape = 'u8[8192]{0}', space=vmem, size = 0x2000, scoped, tag = 'output window, operand 0']
    %10 = vsyncpa [#allocation3], 0
    %s11 = scalar_lea.sflag [#allocation3], 1
    %12 = vsyncpa %s11, 0
    %13 = vsyncpa [#allocation6], 0
    %14 = vsyncpa [#allocation4], 0
    %s15 = scalar_lea.sflag [#allocation4], 1
    %16 = vsyncpa %s15, 0
    loop: start=0, step=1, limit=4
    $region2: #{tpu_custom_call.1} parent=1 // loop_pre_header
      _
    $region3: #{tpu_custom_call.1} parent=1 // loop_header
      %s18 = sphi 0, %s22
      %p19 = scmp.ge.s32.totalorder %s18, 4
      %s28 = sphi 0, %s30
      %s31 = sphi 0, %s28
      %s32 = sphi 0, %s31
      %s48 = sphi 0, %s32
      %s52 = sphi 0, %s52
      %s54 = sphi 0, %s52
      %s55 = sphi 0, %s54
      %s69 = sphi 0, %s55
      %s73 = sphi 0, %s73
      %s75 = sphi 0, %s73
      %s76 = sphi 0, %s75
      %s90 = sphi 0, %s76
      %s94 = sphi 0, %s94
      %s96 = sphi 0, %s94
      %s97 = sphi 0, %s96
      %s111 = sphi 0, %s97
      %s115 = sphi 0, %s115
      %s117 = sphi 0, %s115
      %s118 = sphi 0, %s117
      %s132 = sphi 0, %s118
      %s138 = sphi 0, %s140
      %s141 = sphi 0, %s138
      %s142 = sphi 0, %s141
      %s158 = sphi 0, %s142
    $region4: #{tpu_custom_call.1} parent=1 // loop_header_branch
      %21 = sbr.rel (%p19) target = $region8
    $region5: #{tpu_custom_call.1} parent=1 // loop_body
      %s23 = ssub.s32 %s18, 1
      %s24 = ssub.s32 %s18, 2
      %s25 = sadd.s32 %s18, 1
      %s26 = ssub.s32 %s18, %s25
      %p27 = scmp.eq.s32.totalorder %s26, 0
      %s29 = sadd.s32 %s28, 1
      %s30 = scalar_select %p27, %s28, %s29
      %p33 = pneg %p27
      %p34 = scmp.eq.s32.totalorder %s18, 1
      %p35 = por %p33, %p34
      %p36 = scmp.ne.s32.totalorder %s28, %s31
      %p37 = scmp.eq.s32.totalorder %s18, 0
      %p38 = por %p36, %p37
      %p39 = scmp.ne.s32.totalorder %s28, %s31
      %p40 = scmp.eq.s32.totalorder %s23, 1
      %p41 = por %p39, %p40
      %p42 = scmp.ne.s32.totalorder %s31, %s32
      %p43 = scmp.eq.s32.totalorder %s23, 0
      %p44 = por %p42, %p43
      %p45 = scmp.ne.s32.totalorder %s31, %s32
      %p46 = scmp.eq.s32.totalorder %s24, 1
      %p47 = por %p45, %p46
      %p49 = scmp.ne.s32.totalorder %s32, %s48
      %p50 = scmp.eq.s32.totalorder %s24, 0
      %p51 = por %p49, %p50
      %s53 = sadd.s32 %s52, 1
      %p56 = scmp.eq.s32.totalorder %s18, 1
      %p57 = scmp.ne.s32.totalorder %s52, %s54
      %p58 = scmp.eq.s32.totalorder %s18, 0
      %p59 = por %p57, %p58
      %p60 = scmp.ne.s32.totalorder %s52, %s54
      %p61 = scmp.eq.s32.totalorder %s23, 1
      %p62 = por %p60, %p61
      %p63 = scmp.ne.s32.totalorder %s54, %s55
      %p64 = scmp.eq.s32.totalorder %s23, 0
      %p65 = por %p63, %p64
      %p66 = scmp.ne.s32.totalorder %s54, %s55
      %p67 = scmp.eq.s32.totalorder %s24, 1
      %p68 = por %p66, %p67
      %p70 = scmp.ne.s32.totalorder %s55, %s69
      %p71 = scmp.eq.s32.totalorder %s24, 0
      %p72 = por %p70, %p71
      %s74 = sadd.s32 %s73, 1
      %p77 = scmp.eq.s32.totalorder %s18, 1
      %p78 = scmp.ne.s32.totalorder %s73, %s75
      %p79 = scmp.eq.s32.totalorder %s18, 0
      %p80 = por %p78, %p79
      %p81 = scmp.ne.s32.totalorder %s73, %s75
      %p82 = scmp.eq.s32.totalorder %s23, 1
      %p83 = por %p81, %p82
      %p84 = scmp.ne.s32.totalorder %s75, %s76
      %p85 = scmp.eq.s32.totalorder %s23, 0
      %p86 = por %p84, %p85
      %p87 = scmp.ne.s32.totalorder %s75, %s76
      %p88 = scmp.eq.s32.totalorder %s24, 1
      %p89 = por %p87, %p88
      %p91 = scmp.ne.s32.totalorder %s76, %s90
      %p92 = scmp.eq.s32.totalorder %s24, 0
      %p93 = por %p91, %p92
      %s95 = sadd.s32 %s94, 1
      %p98 = scmp.eq.s32.totalorder %s18, 1
      %p99 = scmp.ne.s32.totalorder %s94, %s96
      %p100 = scmp.eq.s32.totalorder %s18, 0
      %p101 = por %p99, %p100
      %p102 = scmp.ne.s32.totalorder %s94, %s96
      %p103 = scmp.eq.s32.totalorder %s23, 1
      %p104 = por %p102, %p103
      %p105 = scmp.ne.s32.totalorder %s96, %s97
      %p106 = scmp.eq.s32.totalorder %s23, 0
      %p107 = por %p105, %p106
      %p108 = scmp.ne.s32.totalorder %s96, %s97
      %p109 = scmp.eq.s32.totalorder %s24, 1
      %p110 = por %p108, %p109
      %p112 = scmp.ne.s32.totalorder %s97, %s111
      %p113 = scmp.eq.s32.totalorder %s24, 0
      %p114 = por %p112, %p113
      %s116 = sadd.s32 %s115, 1
      %p119 = scmp.eq.s32.totalorder %s18, 1
      %p120 = scmp.ne.s32.totalorder %s115, %s117
      %p121 = scmp.eq.s32.totalorder %s18, 0
      %p122 = por %p120, %p121
      %p123 = scmp.ne.s32.totalorder %s115, %s117
      %p124 = scmp.eq.s32.totalorder %s23, 1
      %p125 = por %p123, %p124
      %p126 = scmp.ne.s32.totalorder %s117, %s118
      %p127 = scmp.eq.s32.totalorder %s23, 0
      %p128 = por %p126, %p127
      %p129 = scmp.ne.s32.totalorder %s117, %s118
      %p130 = scmp.eq.s32.totalorder %s24, 1
      %p131 = por %p129, %p130
      %p133 = scmp.ne.s32.totalorder %s118, %s132
      %p134 = scmp.eq.s32.totalorder %s24, 0
      %p135 = por %p133, %p134
      %s136 = ssub.s32 %s18, %s25
      %p137 = scmp.eq.s32.totalorder %s136, 0
      %s139 = sadd.s32 %s138, 1
      %s140 = scalar_select %p137, %s138, %s139
      %p143 = pneg %p137
      %p144 = scmp.eq.s32.totalorder %s18, 1
      %p145 = por %p143, %p144
      %p146 = scmp.ne.s32.totalorder %s138, %s141
      %p147 = scmp.eq.s32.totalorder %s18, 0
      %p148 = por %p146, %p147
      %p149 = scmp.ne.s32.totalorder %s138, %s141
      %p150 = scmp.eq.s32.totalorder %s23, 1
      %p151 = por %p149, %p150
      %p152 = scmp.ne.s32.totalorder %s141, %s142
      %p153 = scmp.eq.s32.totalorder %s23, 0
      %p154 = por %p152, %p153
      %p155 = scmp.ne.s32.totalorder %s141, %s142
      %p156 = scmp.eq.s32.totalorder %s24, 1
      %p157 = por %p155, %p156
      %p159 = scmp.ne.s32.totalorder %s142, %s158
      %p160 = scmp.eq.s32.totalorder %s24, 0
      %p161 = por %p159, %p160
      %p162 = scmp.le.s32.totalorder 1, %s18
      %p163 = scmp.lt.s32.totalorder %s18, 3
      %p164 = pnand %p162, %p163
      %p165 = pneg %p164
      // Predicated region
      $region9: #{tpu_custom_call.1} parent=5 // pred_check
        _
      $region10: #{tpu_custom_call.1} parent=5 // pred_check_branch
        %167 = sbr.rel (%p164) target = $region12
      $region11: #{tpu_custom_call.1} parent=5 // pred_region
        %s168 = ssub.s32 %s18, 1
        // Predicated region
        $region13: #{tpu_custom_call.1} parent=11 // pred_check
          %p169 = pneg %p65
        $region14: #{tpu_custom_call.1} parent=11 // pred_check_branch
          %171 = sbr.rel (%p169) target = $region16
        $region15: #{tpu_custom_call.1} parent=11 // pred_region
          %s173 = ssub.s32 512, 512
          %174 = vsyncadd [#allocation6], %s173
          %s175 = sshll.u32 [#allocation5], 4
          %s176 = int_to_ptr.vmem [resolvable:$true] %s175
          %181 = dma.hbm_to_vmem [thread:$0]  %s1, 512, %s176, [#allocation6], 128, 128, 8
        $region16: #{tpu_custom_call.1} parent=11 // pred_fallthru
          _
        // Predicated region
        $region17: #{tpu_custom_call.1} parent=11 // pred_check
          %p182 = pneg %p86
        $region18: #{tpu_custom_call.1} parent=11 // pred_check_branch
          %184 = sbr.rel (%p182) target = $region20
        $region19: #{tpu_custom_call.1} parent=11 // pred_region
          _
        $region20: #{tpu_custom_call.1} parent=11 // pred_fallthru
          _
        // Predicated region
        $region21: #{tpu_custom_call.1} parent=11 // pred_check
          %p185 = pneg %p107
        $region22: #{tpu_custom_call.1} parent=11 // pred_check_branch
          %187 = sbr.rel (%p185) target = $region24
        $region23: #{tpu_custom_call.1} parent=11 // pred_region
          _
        $region24: #{tpu_custom_call.1} parent=11 // pred_fallthru
          _
        // Predicated region
        $region25: #{tpu_custom_call.1} parent=11 // pred_check
          %p188 = pneg %p128
        $region26: #{tpu_custom_call.1} parent=11 // pred_check_branch
          %190 = sbr.rel (%p188) target = $region28
        $region27: #{tpu_custom_call.1} parent=11 // pred_region
          _
        $region28: #{tpu_custom_call.1} parent=11 // pred_fallthru
          _
      $region12: #{tpu_custom_call.1} parent=5 // pred_fallthru
        _
      %p191 = scmp.lt.s32.totalorder %s18, 2
      // Predicated region
      $region29: #{tpu_custom_call.1} parent=5 // pred_check
        %p192 = pneg %p191
      $region30: #{tpu_custom_call.1} parent=5 // pred_check_branch
        %194 = sbr.rel (%p192) target = $region32
      $region31: #{tpu_custom_call.1} parent=5 // pred_region
        // Predicated region
        $region33: #{tpu_custom_call.1} parent=31 // pred_check
          %p195 = pneg %p38
        $region34: #{tpu_custom_call.1} parent=31 // pred_check_branch
          %197 = sbr.rel (%p195) target = $region36
        $region35: #{tpu_custom_call.1} parent=31 // pred_region
          %s198 = sand.u32 %s28, 1
          %s199 = scalar_lea.sflag [#allocation3], %s198
          %s200 = sand.u32 %s28, 1
          %s201 = smul.addr %s200, 8
          %s202 = scalar_lea.vmem [#allocation2], %s201
          %s204 = ssub.s32 128, 128
          %205 = vsyncadd %s199, %s204
          %s206 = smul.addr %s18, 128
          %s207 = scalar_lea.hbm %s0, %s206
          %s209 = sshll.u32 %s202, 4
          %s210 = int_to_ptr.vmem [resolvable:$true] %s209
          %212 = dma.hbm_to_vmem [thread:$0]  %s207, 128, %s210, %s199
        $region36: #{tpu_custom_call.1} parent=31 // pred_fallthru
          _
      $region32: #{tpu_custom_call.1} parent=5 // pred_fallthru
        _
      %p213 = scmp.le.s32.totalorder 1, %s18
      %p214 = scmp.lt.s32.totalorder %s18, 3
      %p215 = pnand %p213, %p214
      %p216 = pneg %p215
      // Predicated region
      $region37: #{tpu_custom_call.1} parent=5 // pred_check
        _
      $region38: #{tpu_custom_call.1} parent=5 // pred_check_branch
        %218 = sbr.rel (%p215) target = $region40
      $region39: #{tpu_custom_call.1} parent=5 // pred_region
        %s219 = ssub.s32 %s18, 1
        %s220 = sand.u32 %s31, 1
        %s221 = scalar_lea.sflag [#allocation3], %s220
        %s222 = sand.u32 %s31, 1
        %s223 = smul.addr %s222, 8
        %s224 = scalar_lea.vmem [#allocation2], %s223
        // Predicated region
        $region41: #{tpu_custom_call.1} parent=39 // pred_check
          %p225 = pneg %p44
        $region42: #{tpu_custom_call.1} parent=39 // pred_check_branch
          %227 = sbr.rel (%p225) target = $region44
        $region43: #{tpu_custom_call.1} parent=39 // pred_region
          %228 = dma.done %s221, 128
        $region44: #{tpu_custom_call.1} parent=39 // pred_fallthru
          _
        // Predicated region
        $region45: #{tpu_custom_call.1} parent=39 // pred_check
          %p229 = pneg %p65
        $region46: #{tpu_custom_call.1} parent=39 // pred_check_branch
          %231 = sbr.rel (%p229) target = $region48
        $region47: #{tpu_custom_call.1} parent=39 // pred_region
          %232 = dma.done [#allocation6], 512
        $region48: #{tpu_custom_call.1} parent=39 // pred_fallthru
          _
        %s233 = sand.u32 %s31, 1
        %s234 = scalar_lea.sflag [#allocation3], %s233
        %s235 = sand.u32 %s31, 1
        %s236 = smul.addr %s235, 8
        %s237 = scalar_lea.vmem [#allocation2], %s236
        %p238 = pneg %p44
        %p239 = pneg %p41
        %p240 = pneg %p65
        %p241 = pneg %p62
        %p242 = pneg %p86
        %p243 = pneg %p83
        %p244 = pneg %p107
        %p245 = pneg %p104
        %p246 = pneg %p128
        %p247 = pneg %p125
        %p248 = pneg %p154
        %p249 = pneg %p151
        %s250 = sand.u32 %s141, 1
        %s251 = scalar_lea.sflag [#allocation4], %s250
        %s252 = sand.u32 %s141, 1
        %s253 = smul.addr %s252, 8
        %s254 = scalar_lea.vmem [#allocation7], %s253
        %v255 = vld [vmem:[%s224] sm:$0xff]
        %v256 = vld [vmem:[#allocation5] sm:$0xff]
        %v257 = vld [vmem:[#allocation5 + $0x8] sm:$0xff]
        %v258 = vld [vmem:[#allocation5 + $0x10] sm:$0xff]
        %v259 = vld [vmem:[#allocation5 + $0x18] sm:$0xff]
        %v260 = vld [vmem:[%s2] sm:$0x1]
        %v262 = vlaneseq
        %v263 = vshrl.u32 %v262, 7
        %v264 = vsub.s32 0, %v263
        %v265 = vrot.slane %v260, %v264
        %vm267 = vcmask 261120
        %v269 = vsel %vm267, %v255, 0
        %271 = vmatprep.subr.mxu0 0.0
        %272 = vmatpush1.msra.mxu0 %v256
        %273 = vmatprep.subr.mxu0 0.0
        %274 = vmatpush1.msra.mxu0 %v257
        %275 = vmatprep.subr.mxu0 0.0
        %276 = vmatpush1.msra.mxu0 %v258
        %277 = vmatprep.subr.mxu0 0.0
        %278 = vmatpush1.msra.mxu0 %v259
        %279 = vmatprep.subr.mxu0 0.0
        %280 = vmatpush1.msra.mxu0 0.0
        %281 = vmatprep.subr.mxu0 0.0
        %282 = vmatpush1.msra.mxu0 0.0
        %283 = vmatprep.subr.mxu0 0.0
        %284 = vmatpush1.msra.mxu0 0.0
        %285 = vmatprep.subr.mxu0 0.0
        %286 = vmatpush1.msra.mxu0 0.0
        %287 = vmatprep.subr.mxu0 0.0
        %288 = vmatpush1.msra.mxu0 0.0
        %289 = vmatprep.subr.mxu0 0.0
        %290 = vmatpush1.msra.mxu0 0.0
        %291 = vmatprep.subr.mxu0 0.0
        %292 = vmatpush1.msra.mxu0 0.0
        %293 = vmatprep.subr.mxu0 0.0
        %294 = vmatpush1.msra.mxu0 0.0
        %295 = vmatprep.subr.mxu0 0.0
        %296 = vmatpush1.msra.mxu0 0.0
        %297 = vmatprep.subr.mxu0 0.0
        %298 = vmatpush1.msra.mxu0 0.0
        %299 = vmatprep.subr.mxu0 0.0
        %300 = vmatpush1.msra.mxu0 0.0
        %301 = vmatprep.subr.mxu0 0.0
        %302 = vmatpush1.msra.mxu0 0.0
        %303 = vmatprep.subr.mxu0 0.0
        %304 = vmatpush1.msra.mxu0 0.0
        %305 = vmatprep.subr.mxu0 0.0
        %306 = vmatpush1.msra.mxu0 0.0
        %307 = vmatprep.subr.mxu0 0.0
        %308 = vmatpush1.msra.mxu0 0.0
        %309 = vmatprep.subr.mxu0 0.0
        %310 = vmatpush1.msra.mxu0 0.0
        %311 = vmatprep.subr.mxu0 0.0
        %312 = vmatpush1.msra.mxu0 0.0
        %313 = vmatprep.subr.mxu0 0.0
        %314 = vmatpush1.msra.mxu0 0.0
        %315 = vmatprep.subr.mxu0 0.0
        %316 = vmatpush1.msra.mxu0 0.0
        %317 = vmatprep.subr.mxu0 0.0
        %318 = vmatpush1.msra.mxu0 0.0
        %319 = vmatprep.subr.mxu0 0.0
        %320 = vmatpush1.msra.mxu0 0.0
        %321 = vmatprep.subr.mxu0 0.0
        %322 = vmatpush1.msra.mxu0 0.0
        %323 = vmatprep.subr.mxu0 0.0
        %324 = vmatpush1.msra.mxu0 0.0
        %325 = vmatprep.subr.mxu0 0.0
        %326 = vmatpush1.msra.mxu0 0.0
        %327 = vmatprep.subr.mxu0 0.0
        %328 = vmatpush1.msra.mxu0 0.0
        %329 = vmatprep.subr.mxu0 0.0
        %330 = vmatpush1.msra.mxu0 0.0
        %331 = vmatprep.subr.mxu0 0.0
        %332 = vmatpush1.msra.mxu0 0.0
        %333 = vmatprep.subr.mxu0 0.0
        %334 = vmatpush1.msra.mxu0 0.0
        %335 = vmatprep.mubr.f32.mxu0 0.0
        %336 = vmatmul.mubr.f32.gmra.mrb[0].mxu0 %v269
        %v337 = vpop.f32.mrb[0].mxu0
        %v338 = vadd.f32 %v265, %v337
        %v339 = vpop.f32.mrb[0].mxu0
        %340 = vdwg.mxu0
        %v341 = vmul.f32 %v338, 0.5
        %v342 = vmul.f32 %v338, %v338
        %v343 = vmul.f32 %v342, %v338
        %v344 = vmul.f32 %v343, 0.044715
        %v345 = vadd.f32 %v338, %v344
        %v346 = vmul.f32 %v345, 0.7978846
        %v347 = vtanh.pop %v346
        %v348 = vadd.f32 %v347, 1.0
        %v349 = vmul.f32 %v341, %v348
        %v350 = vsel %vm267, %v349, 0.0
        %351 = vadd.xlane.f32.xlu0 %v350
        %v352 = vpop.xlane.xlu0 %351
        %v353 = vrcp.pop 32.0
        %v354 = vmul.f32 %v352, %v353
        %v355 = vsub.f32 %v349, %v354
        %v356 = vmul.f32 %v355, %v355
        %v357 = vsel %vm267, %v356, 0.0
        %358 = vadd.xlane.f32.xlu0 %v357
        %v359 = vpop.xlane.xlu0 %358
        %v360 = vmul.f32 %v359, %v353
        %v361 = vadd.f32 %v360, 1e-12
        %v362 = vrsqrt.pop %v361
        %v363 = vmul.f32 %v355, %v362
        %v364 = vld [vmem:[%s3] sm:$0x1]
        %v366 = vlaneseq
        %v367 = vshrl.u32 %v366, 7
        %v368 = vsub.s32 0, %v367
        %v369 = vrot.slane %v364, %v368
        %v371 = vmul.f32 %v363, %v369
        %v372 = vld [vmem:[%s4] sm:$0x1]
        %v374 = vlaneseq
        %v375 = vshrl.u32 %v374, 7
        %v376 = vsub.s32 0, %v375
        %v377 = vrot.slane %v372, %v376
        %v379 = vadd.f32 %v371, %v377
        %380 = vst.msk [vmem:[%s254] sm:$0xff] %vm267, %v379
        %s381 = sand.u32 %s141, 1
        %s382 = scalar_lea.sflag [#allocation4], %s381
        %s383 = sand.u32 %s141, 1
        %s384 = smul.addr %s383, 8
        %s385 = scalar_lea.vmem [#allocation7], %s384
        // Predicated region
        $region49: #{tpu_custom_call.1} parent=39 // pred_check
          %p386 = pneg %p151
        $region50: #{tpu_custom_call.1} parent=39 // pred_check_branch
          %388 = sbr.rel (%p386) target = $region52
        $region51: #{tpu_custom_call.1} parent=39 // pred_region
          %s390 = ssub.s32 128, 128
          %391 = vsyncadd %s382, %s390
          %s392 = smul.addr %s23, 128
          %s393 = scalar_lea.hbm %s5, %s392
          %s395 = sshll.u32 %s385, 4
          %s396 = int_to_ptr.vmem [resolvable:$true] %s395
          %398 = dma.vmem_to_hbm [thread:$0]  %s396, 128, %s393, %s382
        $region52: #{tpu_custom_call.1} parent=39 // pred_fallthru
          _
      $region40: #{tpu_custom_call.1} parent=5 // pred_fallthru
        _
      %p399 = scmp.le.s32.totalorder 2, %s18
      // Predicated region
      $region53: #{tpu_custom_call.1} parent=5 // pred_check
        %p400 = pneg %p399
      $region54: #{tpu_custom_call.1} parent=5 // pred_check_branch
        %402 = sbr.rel (%p400) target = $region56
      $region55: #{tpu_custom_call.1} parent=5 // pred_region
        %s403 = ssub.s32 %s18, 2
        // Predicated region
        $region57: #{tpu_custom_call.1} parent=55 // pred_check
          %p404 = pneg %p157
        $region58: #{tpu_custom_call.1} parent=55 // pred_check_branch
          %406 = sbr.rel (%p404) target = $region60
        $region59: #{tpu_custom_call.1} parent=55 // pred_region
          %s407 = sand.u32 %s142, 1
          %s408 = scalar_lea.sflag [#allocation4], %s407
          %s409 = sand.u32 %s142, 1
          %s410 = smul.addr %s409, 8
          %s411 = scalar_lea.vmem [#allocation7], %s410
          %412 = dma.done %s408, 128
        $region60: #{tpu_custom_call.1} parent=55 // pred_fallthru
          _
      $region56: #{tpu_custom_call.1} parent=5 // pred_fallthru
        _
    $region6: #{tpu_custom_call.1} parent=1 // loop_footer
      %s22 = sadd.s32 1, %s18
    $region7: #{tpu_custom_call.1} parent=1 // loop_footer_branch
      %17 = sbr.rel target = $region3
    $region8: #{tpu_custom_call.1} parent=1 // loop_exit
      _
    %413 = vsyncpa [#allocation3], 1
    %s414 = scalar_lea.sflag [#allocation3], 1
    %415 = vsyncpa %s414, 1
    %416 = vsyncpa [#allocation6], 1
    %417 = vsyncpa [#allocation4], 1
    %s418 = scalar_lea.sflag [#allocation4], 1
    %419 = vsyncpa %s418, 1

</llo_original>
